<compile_context>
chip_gen: v5e
topology: v5e:2x2
jax: 0.10.0
libtpu: 0.0.40
codegen_flags: <defaults>
</compile_context>

<pallas_src>
import numpy as np
import jax
import jax.numpy as jnp
from jax.experimental import pallas as pl
from jax.experimental.pallas import tpu as pltpu


def _round_up(x, m):
    return ((x + m - 1) // m) * m


# ----------------- Phase 1: xw = x @ W1 (row-streaming, large tiles) -----------------

def _xw_kernel(x_ref, w1_ref, xw_ref):
    xw_ref[...] = jnp.dot(x_ref[...], w1_ref[...],
                          preferred_element_type=jnp.float32).astype(xw_ref.dtype)


# -- Phase 2 (block-sparse): acc += adjn_t[m,k] @ xw[k] ; out = xw[m]@W2a + acc@W2b --

def _agg_combine_kernel(mid_ref, kid_ref, first_ref, last_ref,
                        adjt_ref, xwk_ref, xwm_ref, w2a_ref, w2b_ref,
                        o_ref, acc_ref, part_ref):
    t = pl.program_id(0)

    @pl.when(first_ref[t] == 1)
    def _():
        acc_ref[...] = jnp.zeros_like(acc_ref)
        # Combine term xw @ W2a hoisted off the last step (halves the epilogue bubble).
        part_ref[...] = jnp.dot(xwm_ref[...], w2a_ref[...],
                                preferred_element_type=jnp.float32)

    # Streaming hot loop: one MXU matmul per nonzero adjacency block, f32 accumulation.
    acc_ref[...] += jnp.dot(adjt_ref[...], xwk_ref[...],
                            preferred_element_type=jnp.float32)

    @pl.when(last_ref[t] == 1)
    def _():
        o_ref[...] = (part_ref[...] +
                      jnp.dot(acc_ref[...].astype(w2b_ref.dtype), w2b_ref[...],
                              preferred_element_type=jnp.float32)).astype(o_ref.dtype)


# ------------------------------------- Wrapper ---------------------------------------

def custom_conv(x, edge_index, w1, w2, *, block_m=None, block_k=None,
                compute_dtype=jnp.bfloat16):
    """x: (N, C) float32 node features; edge_index: (2, E) int32 [src; dst].

    Note: the block-sparse schedule is built host-side (like the module's cached
    normalized adjacency), so this wrapper is not end-to-end jit-traceable.
    """
    n, c_in = x.shape
    c_out = w1.shape[1]
    assert w2.shape == (2 * c_in, c_out)
    out_dtype = x.dtype
    act_bytes = jnp.dtype(compute_dtype).itemsize

    # ---- per-generation VMEM budget (v7x has 64 MiB/TC, v5e/v6e 128 MiB) ----
    try:
        info = pltpu.get_tpu_info()
        vmem_cap = int(getattr(info, "vmem_capacity_bytes", 0)) or (64 << 20)
    except Exception:  # pragma: no cover - conservative fallback
        vmem_cap = 64 << 20
    vmem_limit = min(vmem_cap * 3 // 4, 100 << 20)
    budget = int(vmem_limit * 0.8)

    cp = _round_up(max(c_in, c_out), 128)     # lane-dense channel padding

    # ---- tile selection: big tiles (256x256 was per-grid-step-overhead bound) ----
    n128 = _round_up(n, 128)
    if block_m is None:
        block_m = n128 if n128 <= 1024 else 512
    if block_k is None:
        block_k = n128 if n128 <= 2048 else 2048

    def _p2_bytes(bm, bk):
        return (2 * bm * bk * act_bytes      # adj tiles (double-buffered)
                + 2 * bk * cp * act_bytes    # xw[k] stream
                + 2 * bm * cp * act_bytes    # xw[m] (resident per row tile)
                + 2 * bm * cp * 4            # f32 output tile
                + 2 * bm * cp * 4            # acc + part scratch
                + 2 * cp * cp * act_bytes)   # w2a + w2b (resident)

    while _p2_bytes(block_m, block_k) > budget and block_k > 128:
        block_k = max(128, _round_up(block_k // 2, 128))
    while _p2_bytes(block_m, block_k) > budget and block_m > 128:
        block_m = max(128, _round_up(block_m // 2, 128))

    # Ensure one tile size divides the other so a single padded size serves both
    # (fixes the previous round_up(round_up(n, bm), bk) divisibility bug).
    if block_k % block_m != 0 and block_m % block_k != 0:
        block_k = _round_up(block_k, block_m)
    np_pad = _round_up(n, max(block_m, block_k))

    # Phase-1 row tile: as large as divides np_pad and fits the VMEM budget.
    block_m1 = block_m
    for bm1 in (4096, 2048, 1024, 512, 256, np_pad):
        if (bm1 <= np_pad and np_pad % bm1 == 0 and bm1 > block_m1
                and 4 * bm1 * cp * act_bytes + 2 * cp * cp * act_bytes <= budget):
            block_m1 = bm1

    # ---- graph glue: self loops, degrees, per-edge GCN norm (all O(E)) ----
    row, col = edge_index[0], edge_index[1]
    e = edge_index.shape[1]
    ew = jnp.ones((e,), jnp.float32)
    # add_remaining_self_loops(fill_value=1): weight-0 loops for nodes that already
    # have a self loop (harmless), weight-1 loops for the rest.
    has_loop = jnp.zeros((n,), jnp.int32).at[row].max((row == col).astype(jnp.int32))
    loop_w = jnp.where(has_loop > 0, 0.0, 1.0).astype(jnp.float32)
    ar = jnp.arange(n, dtype=row.dtype)
    row2 = jnp.concatenate([row, ar])
    col2 = jnp.concatenate([col, ar])
    ew2 = jnp.concatenate([ew, loop_w])

    deg = jnp.zeros((n,), jnp.float32).at[row2].add(ew2)           # scatter_add(ew, row)
    dinv = jnp.where(deg > 0.0, jax.lax.rsqrt(deg), 0.0)           # deg^-1/2, inf -> 0
    norm = dinv[row2] * ew2 * dinv[col2]                           # per-edge GCN norm

    # ---- normalized transposed adjacency, built directly at padded size & dtype ----
    # agg = adjn_t @ xw with adjn_t[dst, src] = sum_e norm_e; dinv fully folded in,
    # so the kernels carry neither dinv nor a separate `y` array.
    adjn_t = jnp.zeros((np_pad, np_pad), compute_dtype).at[col2, row2].add(
        norm.astype(compute_dtype))

    # ---- pad + cast the dense operands ----
    x_p = jnp.zeros((np_pad, cp), compute_dtype).at[:n, :c_in].set(
        x.astype(compute_dtype))
    w1_p = jnp.zeros((cp, cp), compute_dtype).at[:c_in, :c_out].set(
        w1.astype(compute_dtype))
    w2a = jnp.zeros((cp, cp), compute_dtype).at[:c_in, :c_out].set(
        w2[:c_in, :].astype(compute_dtype))
    w2b = jnp.zeros((cp, cp), compute_dtype).at[:c_in, :c_out].set(
        w2[c_in:, :].astype(compute_dtype))

    # ---- phase 1: xw = x @ W1, streamed in large row tiles ----
    xw_p = pl.pallas_call(
        _xw_kernel,
        out_shape=jax.ShapeDtypeStruct((np_pad, cp), compute_dtype),
        grid_spec=pltpu.PrefetchScalarGridSpec(
            num_scalar_prefetch=0,
            grid=(np_pad // block_m1,),
            in_specs=[pl.BlockSpec((block_m1, cp), lambda m: (m, 0)),
                      pl.BlockSpec((cp, cp), lambda m: (0, 0))],
            out_specs=pl.BlockSpec((block_m1, cp), lambda m: (m, 0)),
        ),
        compiler_params=pltpu.CompilerParams(
            dimension_semantics=("parallel",),
            vmem_limit_bytes=vmem_limit),
    )(x_p, w1_p)

    # ---- block-sparse schedule: list of nonzero (m-tile, k-tile) adjacency blocks ----
    num_m = np_pad // block_m
    num_k = np_pad // block_k
    col2_np = np.asarray(jax.device_get(col2))
    row2_np = np.asarray(jax.device_get(row2))
    mask_np = np.zeros((num_m, num_k), bool)
    mask_np[col2_np // block_m, row2_np // block_k] = True
    mm, kk = np.nonzero(mask_np)          # row-major: each m-tile's k-blocks contiguous
    if mm.size == 0:                      # degenerate safety (can't happen w/ self loops)
        mm, kk = np.array([0]), np.array([0])
    first = np.ones(mm.shape, np.int32)
    first[1:] = (mm[1:] != mm[:-1]).astype(np.int32)
    last = np.ones(mm.shape, np.int32)
    last[:-1] = (mm[1:] != mm[:-1]).astype(np.int32)
    m_ids = jnp.asarray(mm, jnp.int32)
    k_ids = jnp.asarray(kk, jnp.int32)
    firsts = jnp.asarray(first)
    lasts = jnp.asarray(last)
    num_blocks = int(mm.size)

    # ---- phase 2: sparse-scheduled aggregation matmul + combine epilogue ----
    out_p = pl.pallas_call(
        _agg_combine_kernel,
        out_shape=jax.ShapeDtypeStruct((np_pad, cp), jnp.float32),
        grid_spec=pltpu.PrefetchScalarGridSpec(
            num_scalar_prefetch=4,
            grid=(num_blocks,),
            in_specs=[
                pl.BlockSpec((block_m, block_k),
                             lambda t, mi, ki, fi, la: (mi[t], ki[t])),   # adjn_t block
                pl.BlockSpec((block_k, cp),
                             lambda t, mi, ki, fi, la: (ki[t], 0)),       # xw[k]
                pl.BlockSpec((block_m, cp),
                             lambda t, mi, ki, fi, la: (mi[t], 0)),       # xw[m]
                pl.BlockSpec((cp, cp), lambda t, mi, ki, fi, la: (0, 0)),  # W2a
                pl.BlockSpec((cp, cp), lambda t, mi, ki, fi, la: (0, 0)),  # W2b
            ],
            out_specs=pl.BlockSpec((block_m, cp),
                                   lambda t, mi, ki, fi, la: (mi[t], 0)),
            scratch_shapes=[pltpu.VMEM((block_m, cp), jnp.float32),   # acc
                            pltpu.VMEM((block_m, cp), jnp.float32)],  # xw @ W2a part
        ),
        compiler_params=pltpu.CompilerParams(
            dimension_semantics=("arbitrary",),
            vmem_limit_bytes=vmem_limit),
    )(m_ids, k_ids, firsts, lasts, adjn_t, xw_p, xw_p, w2a, w2b)

    return out_p[:n, :c_out].astype(out_dtype)


# ------------------------------- Pure-JAX reference ----------------------------------

def custom_conv_ref(x, edge_index, w1, w2):
    """Scatter-based reference mirroring the PyTorch message passing."""
    n = x.shape[0]
    xw = x @ w1
    row, col = edge_index[0], edge_index[1]
    ew = jnp.ones((edge_index.shape[1],), dtype=x.dtype)

    # add_remaining_self_loops(fill_value=1)
    has_loop = jnp.zeros((n,), jnp.int32).at[row].max((row == col).astype(jnp.int32))
    loop_w = jnp.where(has_loop > 0, 0.0, 1.0).astype(x.dtype)
    row2 = jnp.concatenate([row, jnp.arange(n, dtype=row.dtype)])
    col2 = jnp.concatenate([col, jnp.arange(n, dtype=col.dtype)])
    ew2 = jnp.concatenate([ew, loop_w])

    deg = jnp.zeros((n,), x.dtype).at[row2].add(ew2)
    dinv = jnp.where(deg > 0.0, 1.0 / jnp.sqrt(deg), 0.0)
    norm = dinv[row2] * ew2 * dinv[col2]

    msg = norm[:, None] * xw[row2]                       # msg='identity', alpha=1
    agg = jnp.zeros_like(xw).at[col2].add(msg)           # agg='add'
    return jnp.concatenate([xw, agg], axis=1) @ w2       # combine='concat'


if __name__ == "__main__":
    key = jax.random.PRNGKey(0)
    n, c = 200, 32                                       # num_nodes, in==out channels
    k_x, k_w1, k_w2 = jax.random.split(key, 3)

    x = jax.random.normal(k_x, (n, c), jnp.float32)

    # glorot-uniform init (deterministic), shapes from CustomConvLayer.__init__
    lim1 = (6.0 / (c + c)) ** 0.5
    w1 = jax.random.uniform(k_w1, (c, c), jnp.float32, -lim1, lim1)        # lin_weight
    lim2 = (6.0 / (2 * c + c)) ** 0.5
    w2 = jax.random.uniform(k_w2, (2 * c, c), jnp.float32, -lim2, lim2)    # lin_weight2

    # small deterministic directed graph: ring + a few extra edges + one self-loop
    src = jnp.array(list(range(n)) + [0, 3, 7, 5], dtype=jnp.int32)
    dst = jnp.array([(i + 1) % n for i in range(n)] + [8, 12, 2, 5], dtype=jnp.int32)
    edge_index = jnp.stack([src, dst])                   # (2, 204)

    ref = custom_conv_ref(x, edge_index, w1, w2)

    # f32 compute path: exactness check
    out_f32 = jax.block_until_ready(
        custom_conv(x, edge_index, w1, w2, compute_dtype=jnp.float32))
    assert out_f32.shape == (n, c) and out_f32.dtype == jnp.float32
    assert jnp.allclose(out_f32, ref, atol=5e-4, rtol=5e-4), \
        float(jnp.max(jnp.abs(out_f32 - ref)))

    # default fast path: bf16 MXU operands (normalized adjacency + xw), f32 accumulation
    out = jax.block_until_ready(custom_conv(x, edge_index, w1, w2))
    assert out.shape == (n, c) and out.dtype == jnp.float32
    assert jnp.allclose(out, ref, atol=1e-1, rtol=1e-1), \
        float(jnp.max(jnp.abs(out - ref)))

    # exercise an explicitly multi-tile block-sparse schedule on the same graph
    out_mt = jax.block_until_ready(
        custom_conv(x, edge_index, w1, w2, block_m=128, block_k=128,
                    compute_dtype=jnp.float32))
    assert jnp.allclose(out_mt, ref, atol=5e-4, rtol=5e-4), \
        float(jnp.max(jnp.abs(out_mt - ref)))

    print("KERNEL_OK")
</pallas_src>

<mosaic_0001>
module attributes {stable_mosaic.version = 11 : i64} {
  func.func @_xw_kernel(%arg0: i32, %arg1: memref<256x128xf32, #tpu.memory_space<vmem>>, %arg2: memref<128x128xf32, #tpu.memory_space<vmem>>, %arg3: memref<256x128xf32, #tpu.memory_space<vmem>>) attributes {dimension_semantics = [#tpu.dimension_semantics<parallel>], iteration_bounds = array<i64: 1>, scalar_prefetch = 0 : i64, scratch_operands = 0 : i64, tpu.core_type = #tpu.core_type<tc>, window_params = [{transform_indices = @transform_0, window_bounds = array<i64: 256, 128>}, {pipeline_mode = #tpu.pipeline_mode<synchronous>, transform_indices = @transform_1, window_bounds = array<i64: 128, 128>}, {transform_indices = @transform_2, window_bounds = array<i64: 256, 128>}]} {
    %c0 = arith.constant 0 : index
    %c0_0 = arith.constant 0 : index
    %0 = vector.load %arg1[%c0, %c0_0] : memref<256x128xf32, #tpu.memory_space<vmem>>, vector<256x128xf32>
    %c0_1 = arith.constant 0 : index
    %c0_2 = arith.constant 0 : index
    %1 = vector.load %arg2[%c0_1, %c0_2] : memref<128x128xf32, #tpu.memory_space<vmem>>, vector<128x128xf32>
    %cst = arith.constant dense<0.000000e+00> : vector<256x128xf32>
    %2 = tpu.matmul %0, %1, %cst {dimension_numbers = #tpu.dot_dimension_numbers<[1], [0], [0], [1], [0, 0, 1, 1], [], []>} : vector<256x128xf32>, vector<128x128xf32>, vector<256x128xf32> -> vector<256x128xf32>
    %c0_3 = arith.constant 0 : index
    %c0_4 = arith.constant 0 : index
    %3 = vector.load %arg3[%c0_3, %c0_4] : memref<256x128xf32, #tpu.memory_space<vmem>>, vector<256x128xf32>
    tpu.vector_store %arg3[%c0_3, %c0_4], %2 {strides = array<i32>} : memref<256x128xf32, #tpu.memory_space<vmem>>, vector<256x128xf32>,
    return
  }
  func.func @transform_0(%arg0: i32) -> (i32, i32) {
    %c0_i32 = arith.constant 0 : i32
    %c0_i32_0 = arith.constant 0 : i32
    return %arg0, %c0_i32 : i32, i32
  }
  func.func @transform_1(%arg0: i32) -> (i32, i32) {
    %c0_i32 = arith.constant 0 : i32
    %c0_i32_0 = arith.constant 0 : i32
    %c0_i32_1 = arith.constant 0 : i32
    return %c0_i32, %c0_i32_0 : i32, i32
  }
  func.func @transform_2(%arg0: i32) -> (i32, i32) {
    %c0_i32 = arith.constant 0 : i32
    %c0_i32_0 = arith.constant 0 : i32
    return %arg0, %c0_i32 : i32, i32
  }
}

</mosaic_0001>

<llo_original>
// kernel: tpu_custom_call.1
$region0: #{tpu_custom_call.1}
  #allocation0 [shape = 'u32[]', space=smem, size = 0x4, offset = 0x4, fixed_abs, tag = 'smem constant byte address 0x4 - core index']
  #allocation1 [shape = 'u32[72,128]{1,0:T(1,128)}', space=vmem, size = 0x9000, scoped, tag = 'internal scratch']
  %s0 = inlined_call_operand.hbm [shape: f32[256,128], index: 0, kind: input, shape index: {}]
  %s1 = inlined_call_operand.hbm [shape: f32[128,128], index: 1, kind: input, shape index: {}]
  %s2 = inlined_call_operand.hbm [shape: f32[256,128], index: 2, kind: output, shape index: {}]
  %s3 = sld [smem:[#allocation0]]
  $region26: #{tpu_custom_call.1} parent=0
    _
  %s5 = ssub.s32 1, %s3
  %s6 = scalar_select 0, %s5, %s3
  $region1: #{tpu_custom_call.1} parent=0
    #allocation2 [shape = 'u8[131072]{0}', space=vmem, size = 0x20000, scoped, tag = 'input window, operand 0, single buffered']
    #allocation3 [shape = 's32[1]{0}', space=sflag, size = 0x4, scoped, tag = 'scoped memory for tpu_custom_call.1']
    #allocation4 [shape = 's32[1]{0}', space=sflag, size = 0x4, scoped, tag = 'scoped memory for tpu_custom_call.1']
    #allocation5 [shape = 'u8[65536]{0}', space=vmem, size = 0x10000, scoped, tag = 'input window, operand 1, single buffered']
    #allocation6 [shape = 's32[1]{0}', space=sflag, size = 0x4, scoped, tag = 'scoped memory for tpu_custom_call.1']
    #allocation7 [shape = 'u8[131072]{0}', space=vmem, size = 0x20000, scoped, tag = 'output window, operand 0, single buffered']
    %7 = vsyncpa [#allocation3], 0
    %8 = vsyncpa [#allocation6], 0
    %9 = vsyncpa [#allocation4], 0
    // Predicated region
    $region2: #{tpu_custom_call.1} parent=1 // pred_check
      _
    $region3: #{tpu_custom_call.1} parent=1 // pred_check_branch
      %11 = sbr.rel (0) target = $region5
    $region4: #{tpu_custom_call.1} parent=1 // pred_region
      %13 = vsyncadd [#allocation3], 0
      %s14 = sshll.u32 %s0, 4
      %s15 = int_to_ptr.hbm [resolvable:$true] %s14
      %s16 = sshll.u32 [#allocation2], 4
      %s17 = int_to_ptr.vmem [resolvable:$true] %s16
      %22 = dma.hbm_to_vmem [thread:$0]  %s15, 4096, %s17, [#allocation3], 128, 128, 8
    $region5: #{tpu_custom_call.1} parent=1 // pred_fallthru
      _
    // Predicated region
    $region6: #{tpu_custom_call.1} parent=1 // pred_check
      _
    $region7: #{tpu_custom_call.1} parent=1 // pred_check_branch
      %24 = sbr.rel (0) target = $region9
    $region8: #{tpu_custom_call.1} parent=1 // pred_region
      %26 = vsyncadd [#allocation6], 0
      %s27 = sshll.u32 %s1, 4
      %s28 = int_to_ptr.hbm [resolvable:$true] %s27
      %s29 = sshll.u32 [#allocation5], 4
      %s30 = int_to_ptr.vmem [resolvable:$true] %s29
      %35 = dma.hbm_to_vmem [thread:$0]  %s28, 2048, %s30, [#allocation6], 128, 128, 8
    $region9: #{tpu_custom_call.1} parent=1 // pred_fallthru
      _
    // Predicated region
    $region10: #{tpu_custom_call.1} parent=1 // pred_check
      _
    $region11: #{tpu_custom_call.1} parent=1 // pred_check_branch
      %37 = sbr.rel (0) target = $region13
    $region12: #{tpu_custom_call.1} parent=1 // pred_region
      %39 = dma.done [#allocation3], 4096
    $region13: #{tpu_custom_call.1} parent=1 // pred_fallthru
      _
    // Predicated region
    $region14: #{tpu_custom_call.1} parent=1 // pred_check
      _
    $region15: #{tpu_custom_call.1} parent=1 // pred_check_branch
      %41 = sbr.rel (0) target = $region17
    $region16: #{tpu_custom_call.1} parent=1 // pred_region
      %43 = dma.done [#allocation6], 2048
    $region17: #{tpu_custom_call.1} parent=1 // pred_fallthru
      _
    %v44 = vld [vmem:[#allocation2] sm:$0xff]
    %v45 = vld [vmem:[#allocation2 + $0x8] sm:$0xff]
    %v46 = vld [vmem:[#allocation2 + $0x10] sm:$0xff]
    %v47 = vld [vmem:[#allocation2 + $0x18] sm:$0xff]
    %v48 = vld [vmem:[#allocation2 + $0x20] sm:$0xff]
    %v49 = vld [vmem:[#allocation2 + $0x28] sm:$0xff]
    %v50 = vld [vmem:[#allocation2 + $0x30] sm:$0xff]
    %v51 = vld [vmem:[#allocation2 + $0x38] sm:$0xff]
    %v52 = vld [vmem:[#allocation2 + $0x40] sm:$0xff]
    %v53 = vld [vmem:[#allocation2 + $0x48] sm:$0xff]
    %v54 = vld [vmem:[#allocation2 + $0x50] sm:$0xff]
    %v55 = vld [vmem:[#allocation2 + $0x58] sm:$0xff]
    %v56 = vld [vmem:[#allocation2 + $0x60] sm:$0xff]
    %v57 = vld [vmem:[#allocation2 + $0x68] sm:$0xff]
    %v58 = vld [vmem:[#allocation2 + $0x70] sm:$0xff]
    %v59 = vld [vmem:[#allocation2 + $0x78] sm:$0xff]
    %v60 = vld [vmem:[#allocation2 + $0x80] sm:$0xff]
    %v61 = vld [vmem:[#allocation2 + $0x88] sm:$0xff]
    %v62 = vld [vmem:[#allocation2 + $0x90] sm:$0xff]
    %v63 = vld [vmem:[#allocation2 + $0x98] sm:$0xff]
    %v64 = vld [vmem:[#allocation2 + $0xa0] sm:$0xff]
    %v65 = vld [vmem:[#allocation2 + $0xa8] sm:$0xff]
    %v66 = vld [vmem:[#allocation2 + $0xb0] sm:$0xff]
    %v67 = vld [vmem:[#allocation2 + $0xb8] sm:$0xff]
    %v68 = vld [vmem:[#allocation2 + $0xc0] sm:$0xff]
    %v69 = vld [vmem:[#allocation2 + $0xc8] sm:$0xff]
    %v70 = vld [vmem:[#allocation2 + $0xd0] sm:$0xff]
    %v71 = vld [vmem:[#allocation2 + $0xd8] sm:$0xff]
    %v72 = vld [vmem:[#allocation2 + $0xe0] sm:$0xff]
    %v73 = vld [vmem:[#allocation2 + $0xe8] sm:$0xff]
    %v74 = vld [vmem:[#allocation2 + $0xf0] sm:$0xff]
    %v75 = vld [vmem:[#allocation2 + $0xf8] sm:$0xff]
    %v76 = vld [vmem:[#allocation5] sm:$0xff]
    %v77 = vld [vmem:[#allocation5 + $0x8] sm:$0xff]
    %v78 = vld [vmem:[#allocation5 + $0x10] sm:$0xff]
    %v79 = vld [vmem:[#allocation5 + $0x18] sm:$0xff]
    %v80 = vld [vmem:[#allocation5 + $0x20] sm:$0xff]
    %v81 = vld [vmem:[#allocation5 + $0x28] sm:$0xff]
    %v82 = vld [vmem:[#allocation5 + $0x30] sm:$0xff]
    %v83 = vld [vmem:[#allocation5 + $0x38] sm:$0xff]
    %v84 = vld [vmem:[#allocation5 + $0x40] sm:$0xff]
    %v85 = vld [vmem:[#allocation5 + $0x48] sm:$0xff]
    %v86 = vld [vmem:[#allocation5 + $0x50] sm:$0xff]
    %v87 = vld [vmem:[#allocation5 + $0x58] sm:$0xff]
    %v88 = vld [vmem:[#allocation5 + $0x60] sm:$0xff]
    %v89 = vld [vmem:[#allocation5 + $0x68] sm:$0xff]
    %v90 = vld [vmem:[#allocation5 + $0x70] sm:$0xff]
    %v91 = vld [vmem:[#allocation5 + $0x78] sm:$0xff]
    %92 = vmatpush.msra.mxu0 %v91
    %93 = vmatpush.msra.mxu0 %v90
    %94 = vmatpush.msra.mxu0 %v89
    %95 = vmatpush.msra.mxu0 %v88
    %96 = vmatpush.msra.mxu0 %v87
    %97 = vmatpush.msra.mxu0 %v86
    %98 = vmatpush.msra.mxu0 %v85
    %99 = vmatpush.msra.mxu0 %v84
    %100 = vmatpush.msra.mxu0 %v83
    %101 = vmatpush.msra.mxu0 %v82
    %102 = vmatpush.msra.mxu0 %v81
    %103 = vmatpush.msra.mxu0 %v80
    %104 = vmatpush.msra.mxu0 %v79
    %105 = vmatpush.msra.mxu0 %v78
    %106 = vmatpush.msra.mxu0 %v77
    %107 = vmatpush.msra.mxu0 %v76
    %108 = vmatmul.f32.gmra.mxu0 %v44
    %v109 = vpop.f32.mrf.mxu0
    %v110 = vadd.f32 0.0, %v109
    %111 = vmatmul.f32.gmra.mxu0 %v45
    %v112 = vpop.f32.mrf.mxu0
    %v113 = vadd.f32 0.0, %v112
    %114 = vmatmul.f32.gmra.mxu0 %v46
    %v115 = vpop.f32.mrf.mxu0
    %v116 = vadd.f32 0.0, %v115
    %117 = vmatmul.f32.gmra.mxu0 %v47
    %v118 = vpop.f32.mrf.mxu0
    %v119 = vadd.f32 0.0, %v118
    %120 = vmatmul.f32.gmra.mxu0 %v48
    %v121 = vpop.f32.mrf.mxu0
    %v122 = vadd.f32 0.0, %v121
    %123 = vmatmul.f32.gmra.mxu0 %v49
    %v124 = vpop.f32.mrf.mxu0
    %v125 = vadd.f32 0.0, %v124
    %126 = vmatmul.f32.gmra.mxu0 %v50
    %v127 = vpop.f32.mrf.mxu0
    %v128 = vadd.f32 0.0, %v127
    %129 = vmatmul.f32.gmra.mxu0 %v51
    %v130 = vpop.f32.mrf.mxu0
    %v131 = vadd.f32 0.0, %v130
    %132 = vmatmul.f32.gmra.mxu0 %v52
    %v133 = vpop.f32.mrf.mxu0
    %v134 = vadd.f32 0.0, %v133
    %135 = vmatmul.f32.gmra.mxu0 %v53
    %v136 = vpop.f32.mrf.mxu0
    %v137 = vadd.f32 0.0, %v136
    %138 = vmatmul.f32.gmra.mxu0 %v54
    %v139 = vpop.f32.mrf.mxu0
    %v140 = vadd.f32 0.0, %v139
    %141 = vmatmul.f32.gmra.mxu0 %v55
    %v142 = vpop.f32.mrf.mxu0
    %v143 = vadd.f32 0.0, %v142
    %144 = vmatmul.f32.gmra.mxu0 %v56
    %v145 = vpop.f32.mrf.mxu0
    %v146 = vadd.f32 0.0, %v145
    %147 = vmatmul.f32.gmra.mxu0 %v57
    %v148 = vpop.f32.mrf.mxu0
    %v149 = vadd.f32 0.0, %v148
    %150 = vmatmul.f32.gmra.mxu0 %v58
    %v151 = vpop.f32.mrf.mxu0
    %v152 = vadd.f32 0.0, %v151
    %153 = vmatmul.f32.gmra.mxu0 %v59
    %v154 = vpop.f32.mrf.mxu0
    %v155 = vadd.f32 0.0, %v154
    %156 = vmatmul.f32.gmra.mxu0 %v60
    %v157 = vpop.f32.mrf.mxu0
    %v158 = vadd.f32 0.0, %v157
    %159 = vmatmul.f32.gmra.mxu0 %v61
    %v160 = vpop.f32.mrf.mxu0
    %v161 = vadd.f32 0.0, %v160
    %162 = vmatmul.f32.gmra.mxu0 %v62
    %v163 = vpop.f32.mrf.mxu0
    %v164 = vadd.f32 0.0, %v163
    %165 = vmatmul.f32.gmra.mxu0 %v63
    %v166 = vpop.f32.mrf.mxu0
    %v167 = vadd.f32 0.0, %v166
    %168 = vmatmul.f32.gmra.mxu0 %v64
    %v169 = vpop.f32.mrf.mxu0
    %v170 = vadd.f32 0.0, %v169
    %171 = vmatmul.f32.gmra.mxu0 %v65
    %v172 = vpop.f32.mrf.mxu0
    %v173 = vadd.f32 0.0, %v172
    %174 = vmatmul.f32.gmra.mxu0 %v66
    %v175 = vpop.f32.mrf.mxu0
    %v176 = vadd.f32 0.0, %v175
    %177 = vmatmul.f32.gmra.mxu0 %v67
    %v178 = vpop.f32.mrf.mxu0
    %v179 = vadd.f32 0.0, %v178
    %180 = vmatmul.f32.gmra.mxu0 %v68
    %v181 = vpop.f32.mrf.mxu0
    %v182 = vadd.f32 0.0, %v181
    %183 = vmatmul.f32.gmra.mxu0 %v69
    %v184 = vpop.f32.mrf.mxu0
    %v185 = vadd.f32 0.0, %v184
    %186 = vmatmul.f32.gmra.mxu0 %v70
    %v187 = vpop.f32.mrf.mxu0
    %v188 = vadd.f32 0.0, %v187
    %189 = vmatmul.f32.gmra.mxu0 %v71
    %v190 = vpop.f32.mrf.mxu0
    %v191 = vadd.f32 0.0, %v190
    %192 = vmatmul.f32.gmra.mxu0 %v72
    %v193 = vpop.f32.mrf.mxu0
    %v194 = vadd.f32 0.0, %v193
    %195 = vmatmul.f32.gmra.mxu0 %v73
    %v196 = vpop.f32.mrf.mxu0
    %v197 = vadd.f32 0.0, %v196
    %198 = vmatmul.f32.gmra.mxu0 %v74
    %v199 = vpop.f32.mrf.mxu0
    %v200 = vadd.f32 0.0, %v199
    %201 = vmatmul.f32.gmra.mxu0 %v75
    %v202 = vpop.f32.mrf.mxu0
    %v203 = vadd.f32 0.0, %v202
    %204 = vdwg.mxu0
    %205 = vst [vmem:[#allocation7] sm:$0xff] %v110
    %206 = vst [vmem:[#allocation7 + $0x8] sm:$0xff] %v113
    %207 = vst [vmem:[#allocation7 + $0x10] sm:$0xff] %v116
    %208 = vst [vmem:[#allocation7 + $0x18] sm:$0xff] %v119
    %209 = vst [vmem:[#allocation7 + $0x20] sm:$0xff] %v122
    %210 = vst [vmem:[#allocation7 + $0x28] sm:$0xff] %v125
    %211 = vst [vmem:[#allocation7 + $0x30] sm:$0xff] %v128
    %212 = vst [vmem:[#allocation7 + $0x38] sm:$0xff] %v131
    %213 = vst [vmem:[#allocation7 + $0x40] sm:$0xff] %v134
    %214 = vst [vmem:[#allocation7 + $0x48] sm:$0xff] %v137
    %215 = vst [vmem:[#allocation7 + $0x50] sm:$0xff] %v140
    %216 = vst [vmem:[#allocation7 + $0x58] sm:$0xff] %v143
    %217 = vst [vmem:[#allocation7 + $0x60] sm:$0xff] %v146
    %218 = vst [vmem:[#allocation7 + $0x68] sm:$0xff] %v149
    %219 = vst [vmem:[#allocation7 + $0x70] sm:$0xff] %v152
    %220 = vst [vmem:[#allocation7 + $0x78] sm:$0xff] %v155
    %221 = vst [vmem:[#allocation7 + $0x80] sm:$0xff] %v158
    %222 = vst [vmem:[#allocation7 + $0x88] sm:$0xff] %v161
    %223 = vst [vmem:[#allocation7 + $0x90] sm:$0xff] %v164
    %224 = vst [vmem:[#allocation7 + $0x98] sm:$0xff] %v167
    %225 = vst [vmem:[#allocation7 + $0xa0] sm:$0xff] %v170
    %226 = vst [vmem:[#allocation7 + $0xa8] sm:$0xff] %v173
    %227 = vst [vmem:[#allocation7 + $0xb0] sm:$0xff] %v176
    %228 = vst [vmem:[#allocation7 + $0xb8] sm:$0xff] %v179
    %229 = vst [vmem:[#allocation7 + $0xc0] sm:$0xff] %v182
    %230 = vst [vmem:[#allocation7 + $0xc8] sm:$0xff] %v185
    %231 = vst [vmem:[#allocation7 + $0xd0] sm:$0xff] %v188
    %232 = vst [vmem:[#allocation7 + $0xd8] sm:$0xff] %v191
    %233 = vst [vmem:[#allocation7 + $0xe0] sm:$0xff] %v194
    %234 = vst [vmem:[#allocation7 + $0xe8] sm:$0xff] %v197
    %235 = vst [vmem:[#allocation7 + $0xf0] sm:$0xff] %v200
    %236 = vst [vmem:[#allocation7 + $0xf8] sm:$0xff] %v203
    // Predicated region
    $region18: #{tpu_custom_call.1} parent=1 // pred_check
      _
    $region19: #{tpu_custom_call.1} parent=1 // pred_check_branch
      %238 = sbr.rel (0) target = $region21
    $region20: #{tpu_custom_call.1} parent=1 // pred_region
      %240 = vsyncadd [#allocation4], 0
      %s241 = sshll.u32 [#allocation7], 4
      %s242 = int_to_ptr.vmem [resolvable:$true] %s241
      %s243 = sshll.u32 %s2, 4
      %s244 = int_to_ptr.hbm [resolvable:$true] %s243
      %249 = dma.vmem_to_hbm [thread:$0]  %s242, 4096, %s244, [#allocation4], 128, 128, 8
    $region21: #{tpu_custom_call.1} parent=1 // pred_fallthru
      _
    // Predicated region
    $region22: #{tpu_custom_call.1} parent=1 // pred_check
      _
    $region23: #{tpu_custom_call.1} parent=1 // pred_check_branch
      %251 = sbr.rel (0) target = $region25
    $region24: #{tpu_custom_call.1} parent=1 // pred_region
      %253 = dma.done [#allocation4], 4096
    $region25: #{tpu_custom_call.1} parent=1 // pred_fallthru
      _
    %254 = vsyncpa [#allocation3], 1
    %255 = vsyncpa [#allocation6], 1
    %256 = vsyncpa [#allocation4], 1

</llo_original>
